<compile_context>
chip_gen: v5e
topology: v5e:2x2
jax: 0.10.0
libtpu: 0.0.40
codegen_flags: <defaults>
</compile_context>

<pallas_src>
import jax
import jax.numpy as jnp
from jax.experimental import pallas as pl
from jax.experimental.pallas import tpu as pltpu


def _round_up(x, m):
    return (x + m - 1) // m * m


def _pick_row_tile(rows, max_tile):
    """Block row count: multiple of 8 (or the full dim), and at least 2 grid
    steps when possible so the 'parallel' axis can shard across TensorCores."""
    max_tile = max(8, _round_up(max_tile, 8))
    if rows <= 8:
        return rows                                   # one block == full dim
    if rows <= 2 * max_tile:
        return min(max_tile, max(8, _round_up(pl.cdiv(rows, 2), 8)))
    return max_tile


def _modrelu_kernel(b_ref, x_ref, o_ref):
    # b_ref : (1,) f32 bias in SMEM
    # x_ref : (2, TM, LANES) f32  -> [0] = real plane, [1] = imag plane
    # o_ref : (2, TM, LANES) f32 output planes
    b = b_ref[0]
    xr = x_ref[0]
    xi = x_ref[1]

    sq = xr * xr + xi * xi                            # |x|^2
    nonzero = sq > 0.0
    inv = jax.lax.rsqrt(jnp.where(nonzero, sq, 1.0))  # 1/|x| (safe at 0)
    mag = sq * inv                                    # |x|
    gate = jnp.maximum(mag + b, 0.0)                  # relu(|x| + b)
    scale = gate * inv                                # gate / |x|

    # exp(1j*angle(x)) == x/|x| for |x| > 0; angle(0) == 0 -> multiplier 1, so
    # the real plane gets `gate` at |x| == 0 while the imag plane is already 0
    # (xi == 0 there, so xi * scale == 0 exactly -- no select needed).
    o_ref[0] = jnp.where(nonzero, xr * scale, gate)
    o_ref[1] = xi * scale


def modrelu_forward(x, b, *, lanes=512, row_tile=1024):
    """Pallas implementation of ModReLU.forward.

    x : complex64 array of any shape
    b : scalar float bias (the nn.Parameter, init 0.0 in the module)
    returns a complex64 array with the same shape as x.
    """
    orig_shape = x.shape
    n = x.size

    # One fused XLA pass: complex64 -> stacked float32 planes (2, n).
    planes = jnp.stack(
        [jnp.real(x).astype(jnp.float32).reshape(-1),
         jnp.imag(x).astype(jnp.float32).reshape(-1)], axis=0)

    # Lane-dense layout (2, rows, lanes); pad only when n % lanes != 0.  The
    # zero padding makes the kernel emit gate = max(b, 0) in the padded real
    # positions; that is sliced off below so it never leaks into the result.
    rows = pl.cdiv(n, lanes)
    pad = rows * lanes - n
    if pad:
        planes = jnp.pad(planes, ((0, 0), (0, pad)))
    planes = planes.reshape(2, rows, lanes)

    tile = _pick_row_tile(rows, row_tile)
    grid = (pl.cdiv(rows, tile),)
    blk = pl.BlockSpec((2, tile, lanes), lambda i: (0, i, 0))

    b_arr = jnp.asarray(b, dtype=jnp.float32).reshape(1)

    out = pl.pallas_call(
        _modrelu_kernel,
        out_shape=jax.ShapeDtypeStruct((2, rows, lanes), jnp.float32),
        grid=grid,
        in_specs=[pl.BlockSpec(memory_space=pltpu.MemorySpace.SMEM), blk],
        out_specs=blk,
        compiler_params=pltpu.CompilerParams(
            dimension_semantics=("parallel",),
            vmem_limit_bytes=32 * 1024 * 1024,
        ),
    )(b_arr, planes)

    out = out.reshape(2, rows * lanes)
    if pad:
        out = out[:, :n]
    out_r = out[0].reshape(orig_shape)
    out_i = out[1].reshape(orig_shape)
    # One fused XLA pass: float32 planes -> complex64.
    return jax.lax.complex(out_r, out_i)


def _reference_modrelu(x, b):
    # Direct transcription of the PyTorch forward in JAX.
    mag = jnp.abs(x)
    ang = jnp.angle(x)
    return jax.nn.relu(mag + b) * jnp.exp(1j * ang.astype(jnp.complex64))


if __name__ == "__main__":
    key = jax.random.PRNGKey(0)
    k_r, k_i = jax.random.split(key, 2)

    # Elementwise op on a complex activation tensor: batch=2, seq=8, hidden=256.
    B, S, H = 2, 8, 256
    xr = jax.random.normal(k_r, (B, S, H), dtype=jnp.float32)
    xi = jax.random.normal(k_i, (B, S, H), dtype=jnp.float32)
    x = jax.lax.complex(xr, xi)
    # Exercise the |x| == 0 branch (angle(0) = 0 -> multiplier 1).
    x = x.at[0, 0, 0].set(jnp.complex64(0.0 + 0.0j))

    # PyTorch initializes b = 0 (identity); a negative bias makes the ReLU clip.
    b = jnp.float32(-0.25)

    fwd = jax.jit(modrelu_forward)
    out = jax.block_until_ready(fwd(x, b))

    ref = _reference_modrelu(x, b)

    assert out.shape == x.shape, out.shape
    assert out.dtype == jnp.complex64, out.dtype
    assert jnp.allclose(out, ref, atol=1e-5, rtol=1e-5), (
        jnp.max(jnp.abs(out - ref)))

    print("KERNEL_OK")
</pallas_src>

<mosaic_0001>
module attributes {stable_mosaic.version = 11 : i64} {
  func.func @_modrelu_kernel(%arg0: i32, %arg1: memref<1xf32, #tpu.memory_space<smem>>, %arg2: memref<2x8x512xf32, #tpu.memory_space<vmem>>, %arg3: memref<2x8x512xf32, #tpu.memory_space<vmem>>) attributes {dimension_semantics = [#tpu.dimension_semantics<parallel>], iteration_bounds = array<i64: 1>, scalar_prefetch = 0 : i64, scratch_operands = 0 : i64, tpu.core_type = #tpu.core_type<tc>, window_params = [{transform_indices = @transform_0, window_bounds = array<i64: 1>}, {transform_indices = @transform_1, window_bounds = array<i64: 2, 8, 512>}, {transform_indices = @transform_2, window_bounds = array<i64: 2, 8, 512>}]} {
    %c0 = arith.constant 0 : index
    %0 = memref.load %arg1[%c0] : memref<1xf32, #tpu.memory_space<smem>>
    %c0_0 = arith.constant 0 : index
    %c0_1 = arith.constant 0 : index
    %c0_2 = arith.constant 0 : index
    %1 = vector.load %arg2[%c0_0, %c0_1, %c0_2] : memref<2x8x512xf32, #tpu.memory_space<vmem>>, vector<1x8x512xf32>
    %2 = vector.shape_cast %1 : vector<1x8x512xf32> to vector<8x512xf32>
    %c1 = arith.constant 1 : index
    %c0_3 = arith.constant 0 : index
    %c0_4 = arith.constant 0 : index
    %3 = vector.load %arg2[%c1, %c0_3, %c0_4] : memref<2x8x512xf32, #tpu.memory_space<vmem>>, vector<1x8x512xf32>
    %4 = vector.shape_cast %3 : vector<1x8x512xf32> to vector<8x512xf32>
    %5 = arith.mulf %2, %2 : vector<8x512xf32>
    %6 = arith.mulf %4, %4 : vector<8x512xf32>
    %7 = arith.addf %5, %6 : vector<8x512xf32>
    %cst = arith.constant 0.000000e+00 : f32
    %8 = vector.broadcast %cst : f32 to vector<8x512xf32>
    %9 = arith.cmpf ogt, %7, %8 : vector<8x512xf32>
    %cst_5 = arith.constant 1.000000e+00 : f32
    %10 = vector.broadcast %cst_5 : f32 to vector<8x512xf32>
    %11 = arith.select %9, %7, %10 : vector<8x512xi1>, vector<8x512xf32>
    %12 = math.rsqrt %11 : vector<8x512xf32>
    %13 = arith.mulf %7, %12 : vector<8x512xf32>
    %14 = vector.broadcast %0 : f32 to vector<8x512xf32>
    %15 = arith.addf %13, %14 : vector<8x512xf32>
    %cst_6 = arith.constant 0.000000e+00 : f32
    %16 = vector.broadcast %cst_6 : f32 to vector<8x512xf32>
    %17 = arith.maximumf %15, %16 : vector<8x512xf32>
    %18 = arith.mulf %17, %12 : vector<8x512xf32>
    %19 = arith.mulf %2, %18 : vector<8x512xf32>
    %20 = arith.select %9, %19, %17 : vector<8x512xi1>, vector<8x512xf32>
    %c0_7 = arith.constant 0 : index
    %c0_8 = arith.constant 0 : index
    %c0_9 = arith.constant 0 : index
    %21 = vector.load %arg3[%c0_7, %c0_8, %c0_9] : memref<2x8x512xf32, #tpu.memory_space<vmem>>, vector<1x8x512xf32>
    %22 = vector.shape_cast %21 : vector<1x8x512xf32> to vector<8x512xf32>
    %23 = vector.shape_cast %20 : vector<8x512xf32> to vector<1x8x512xf32>
    tpu.vector_store %arg3[%c0_7, %c0_8, %c0_9], %23 {strides = array<i32>} : memref<2x8x512xf32, #tpu.memory_space<vmem>>, vector<1x8x512xf32>,
    %24 = arith.mulf %4, %18 : vector<8x512xf32>
    %c1_10 = arith.constant 1 : index
    %c0_11 = arith.constant 0 : index
    %c0_12 = arith.constant 0 : index
    %25 = vector.load %arg3[%c1_10, %c0_11, %c0_12] : memref<2x8x512xf32, #tpu.memory_space<vmem>>, vector<1x8x512xf32>
    %26 = vector.shape_cast %25 : vector<1x8x512xf32> to vector<8x512xf32>
    %27 = vector.shape_cast %24 : vector<8x512xf32> to vector<1x8x512xf32>
    tpu.vector_store %arg3[%c1_10, %c0_11, %c0_12], %27 {strides = array<i32>} : memref<2x8x512xf32, #tpu.memory_space<vmem>>, vector<1x8x512xf32>,
    return
  }
  func.func @transform_0(%arg0: i32) -> i32 {
    %c0_i32 = arith.constant 0 : i32
    %c0_i32_0 = arith.constant 0 : i32
    return %c0_i32 : i32
  }
  func.func @transform_1(%arg0: i32) -> (i32, i32, i32) {
    %c0_i32 = arith.constant 0 : i32
    %c0_i32_0 = arith.constant 0 : i32
    %c0_i32_1 = arith.constant 0 : i32
    return %c0_i32, %arg0, %c0_i32_0 : i32, i32, i32
  }
  func.func @transform_2(%arg0: i32) -> (i32, i32, i32) {
    %c0_i32 = arith.constant 0 : i32
    %c0_i32_0 = arith.constant 0 : i32
    %c0_i32_1 = arith.constant 0 : i32
    return %c0_i32, %arg0, %c0_i32_0 : i32, i32, i32
  }
}

</mosaic_0001>

<llo_original>
// kernel: custom-call.1
$region0: #{custom-call.1}
  %s0 = inlined_call_operand.hbm [shape: c64[2,8,256], index: 0, kind: input, shape index: {}]
  %s1 = inlined_call_operand.vmem [shape: f32[2,8,256], index: 1, kind: output, shape index: {}]
  %s2 = scalar_lea.hbm %s0, 32
  $region1: #{custom-call.1} parent=0
    #allocation0 [shape = 's32[1]{0}', space=sflag, size = 0x4, scoped, tag = 'scoped memory for custom-call.1']
    %3 = vsyncpa [#allocation0], 0
    %s5 = sshll.u32 %s2, 4
    %s6 = int_to_ptr.hbm [resolvable:$true] %s5
    %s7 = sshll.u32 %s1, 4
    %s8 = int_to_ptr.vmem [resolvable:$true] %s7
    %10 = dma.hbm_to_vmem [thread:$0]  %s6, 512, %s8, [#allocation0]
    %12 = dma.done [#allocation0], 512
    %13 = vsyncpa [#allocation0], 1

// kernel: custom-call
$region0: #{custom-call}
  %s0 = inlined_call_operand.hbm [shape: c64[2,8,256], index: 0, kind: input, shape index: {}]
  %s1 = inlined_call_operand.vmem [shape: f32[2,8,256], index: 1, kind: output, shape index: {}]
  $region1: #{custom-call} parent=0
    #allocation0 [shape = 's32[1]{0}', space=sflag, size = 0x4, scoped, tag = 'scoped memory for custom-call']
    %2 = vsyncpa [#allocation0], 0
    %s4 = sshll.u32 %s0, 4
    %s5 = int_to_ptr.hbm [resolvable:$true] %s4
    %s6 = sshll.u32 %s1, 4
    %s7 = int_to_ptr.vmem [resolvable:$true] %s6
    %9 = dma.hbm_to_vmem [thread:$0]  %s5, 512, %s7, [#allocation0]
    %11 = dma.done [#allocation0], 512
    %12 = vsyncpa [#allocation0], 1

// kernel: squeeze.2
$region0: #{squeeze.2}
  %s0 = inlined_call_operand.vmem [shape: f32[1,8,512], index: 0, kind: input, shape index: {}]
  %s1 = inlined_call_operand.vmem [shape: f32[2,8,256], index: 1, kind: output, shape index: {}]
  %v2 = vld [vmem:[%s0] sm:$0xff]
  %3 = vst [vmem:[%s1] ss:$2 sm:$0xf] %v2
  %s4 = scalar_lea.vmem %s1, 8
  %5 = vst [vmem:[%s4] ss:$2 sm:$0xf0] %v2
  %s6 = scalar_lea.vmem %s0, 8
  %v7 = vld [vmem:[%s6] sm:$0xff]
  %s8 = scalar_lea.vmem %s1, 8
  %9 = vst [vmem:[%s8] ss:$2 sm:$0xf] %v7
  %s10 = scalar_lea.vmem %s1, 16
  %11 = vst [vmem:[%s10] ss:$2 sm:$0xf0] %v7
  %s12 = scalar_lea.vmem %s0, 16
  %v13 = vld [vmem:[%s12] sm:$0xff]
  %s14 = scalar_lea.vmem %s1, 1
  %15 = vst [vmem:[%s14] ss:$2 sm:$0xf] %v13
  %s16 = scalar_lea.vmem %s1, 9
  %17 = vst [vmem:[%s16] ss:$2 sm:$0xf0] %v13
  %s18 = scalar_lea.vmem %s0, 24
  %v19 = vld [vmem:[%s18] sm:$0xff]
  %s20 = scalar_lea.vmem %s1, 9
  %21 = vst [vmem:[%s20] ss:$2 sm:$0xf] %v19
  %s22 = scalar_lea.vmem %s1, 17
  %23 = vst [vmem:[%s22] ss:$2 sm:$0xf0] %v19

// kernel: squeeze.3
$region0: #{squeeze.3}
  %s0 = inlined_call_operand.vmem [shape: f32[4096], index: 0, kind: input, shape index: {}]
  %s1 = inlined_call_operand.vmem [shape: f32[2,8,256], index: 1, kind: output, shape index: {}]
  %v2 = vld [vmem:[%s0] sm:$0xff]
  %3 = vst [vmem:[%s1] ss:$8 sm:$0x3] %v2
  %s4 = scalar_lea.vmem %s1, 4294967281
  %5 = vst [vmem:[%s4] ss:$8 sm:$0xc] %v2
  %s6 = scalar_lea.vmem %s1, 4294967266
  %7 = vst [vmem:[%s6] ss:$8 sm:$0x30] %v2
  %s8 = scalar_lea.vmem %s1, 4294967251
  %9 = vst [vmem:[%s8] ss:$8 sm:$0xc0] %v2
  %s10 = scalar_lea.vmem %s0, 8
  %v11 = vld [vmem:[%s10] sm:$0xff]
  %s12 = scalar_lea.vmem %s1, 4
  %13 = vst [vmem:[%s12] ss:$8 sm:$0x3] %v11
  %s14 = scalar_lea.vmem %s1, 4294967285
  %15 = vst [vmem:[%s14] ss:$8 sm:$0xc] %v11
  %s16 = scalar_lea.vmem %s1, 4294967270
  %17 = vst [vmem:[%s16] ss:$8 sm:$0x30] %v11
  %s18 = scalar_lea.vmem %s1, 4294967255
  %19 = vst [vmem:[%s18] ss:$8 sm:$0xc0] %v11
  %s20 = scalar_lea.vmem %s0, 16
  %v21 = vld [vmem:[%s20] sm:$0xff]
  %s22 = scalar_lea.vmem %s1, 16
  %23 = vst [vmem:[%s22] ss:$8 sm:$0x3] %v21
  %s24 = scalar_lea.vmem %s1, 1
  %25 = vst [vmem:[%s24] ss:$8 sm:$0xc] %v21
  %s26 = scalar_lea.vmem %s1, 4294967282
  %27 = vst [vmem:[%s26] ss:$8 sm:$0x30] %v21
  %s28 = scalar_lea.vmem %s1, 4294967267
  %29 = vst [vmem:[%s28] ss:$8 sm:$0xc0] %v21
  %s30 = scalar_lea.vmem %s0, 24
  %v31 = vld [vmem:[%s30] sm:$0xff]
  %s32 = scalar_lea.vmem %s1, 20
  %33 = vst [vmem:[%s32] ss:$8 sm:$0x3] %v31
  %s34 = scalar_lea.vmem %s1, 5
  %35 = vst [vmem:[%s34] ss:$8 sm:$0xc] %v31
  %s36 = scalar_lea.vmem %s1, 4294967286
  %37 = vst [vmem:[%s36] ss:$8 sm:$0x30] %v31
  %s38 = scalar_lea.vmem %s1, 4294967271
  %39 = vst [vmem:[%s38] ss:$8 sm:$0xc0] %v31

// kernel: custom-call.2
$region0: #{custom-call.2}
  %s0 = inlined_call_operand.vmem [shape: f32[2,8,256], index: 0, kind: input, shape index: {}]
  %s1 = inlined_call_operand.vmem [shape: f32[2,8,256], index: 1, kind: input, shape index: {}]
  %s2 = inlined_call_operand.hbm [shape: c64[2,8,256], index: 2, kind: output, shape index: {}]
  %s3 = scalar_lea.hbm %s2, 32
  $region1: #{custom-call.2} parent=0
    #allocation0 [shape = 's32[1]{0}', space=sflag, size = 0x4, scoped, tag = 'scoped memory for custom-call.2']
    %4 = vsyncpa [#allocation0], 0
    %s6 = sshll.u32 %s0, 4
    %s7 = int_to_ptr.vmem [resolvable:$true] %s6
    %s8 = sshll.u32 %s2, 4
    %s9 = int_to_ptr.hbm [resolvable:$true] %s8
    %11 = dma.vmem_to_hbm [thread:$0]  %s7, 512, %s9, [#allocation0]
    %13 = dma.done [#allocation0], 512
    %14 = vsyncpa [#allocation0], 1
  $region2: #{custom-call.2} parent=0
    #allocation1 [shape = 's32[1]{0}', space=sflag, size = 0x4, scoped, tag = 'scoped memory for custom-call.2']
    %15 = vsyncpa [#allocation1], 0
    %s17 = sshll.u32 %s1, 4
    %s18 = int_to_ptr.vmem [resolvable:$true] %s17
    %s19 = sshll.u32 %s3, 4
    %s20 = int_to_ptr.hbm [resolvable:$true] %s19
    %22 = dma.vmem_to_hbm [thread:$0]  %s18, 512, %s20, [#allocation1]
    %24 = dma.done [#allocation1], 512
    %25 = vsyncpa [#allocation1], 1

// kernel: modrelu_forward.1
$region0: #{modrelu_forward.1}
  #allocation0 [shape = 'u32[]', space=smem, size = 0x4, offset = 0x4, fixed_abs, tag = 'smem constant byte address 0x4 - core index']
  #allocation1 [shape = 'u32[72,128]{1,0:T(1,128)}', space=vmem, size = 0x9000, scoped, tag = 'internal scratch']
  #allocation2 [shape = 'f32[1]{0:T(128)S(6)}', space=smem, size = 0x200, scoped, tag = 'scoped memory for modrelu_forward.1']
  %s0 = inlined_call_operand.<no memory space> [shape: f32[1], index: 0, kind: input, shape index: {}]
  %s1 = inlined_call_operand.vmem [shape: f32[2,8,512], index: 1, kind: input, shape index: {}]
  %s2 = inlined_call_operand.vmem [shape: f32[2,8,512], index: 2, kind: output, shape index: {}]
  %s3 = sld [smem:[#allocation0]]
  $region18: #{modrelu_forward.1} parent=0
    _
  %s5 = ssub.s32 1, %s3
  %s6 = scalar_select 0, %s5, %s3
  %7 = sst [smem:[#allocation2]] %s0
  // Predicated region
  $region2: #{modrelu_forward.1} parent=0 // pred_check
    _
  $region3: #{modrelu_forward.1} parent=0 // pred_check_branch
    %9 = sbr.rel (0) target = $region5
  $region4: #{modrelu_forward.1} parent=0 // pred_region
    _
  $region5: #{modrelu_forward.1} parent=0 // pred_fallthru
    _
  // Predicated region
  $region6: #{modrelu_forward.1} parent=0 // pred_check
    _
  $region7: #{modrelu_forward.1} parent=0 // pred_check_branch
    %11 = sbr.rel (0) target = $region9
  $region8: #{modrelu_forward.1} parent=0 // pred_region
    _
  $region9: #{modrelu_forward.1} parent=0 // pred_fallthru
    _
  %s12 = sld [smem:[#allocation2]]
  %v13 = vld [vmem:[%s1] sm:$0xff]
  %v14 = vld [vmem:[%s1 + $0x8] sm:$0xff]
  %v15 = vld [vmem:[%s1 + $0x10] sm:$0xff]
  %v16 = vld [vmem:[%s1 + $0x18] sm:$0xff]
  %s17 = scalar_lea.vmem %s1, 32
  %v18 = vld [vmem:[%s17] sm:$0xff]
  %v19 = vld [vmem:[%s17 + $0x8] sm:$0xff]
  %v20 = vld [vmem:[%s17 + $0x10] sm:$0xff]
  %v21 = vld [vmem:[%s17 + $0x18] sm:$0xff]
  %v22 = vmul.f32 %v13, %v13
  %v23 = vmul.f32 %v14, %v14
  %v24 = vmul.f32 %v15, %v15
  %v25 = vmul.f32 %v16, %v16
  %v26 = vmul.f32 %v18, %v18
  %v27 = vmul.f32 %v19, %v19
  %v28 = vmul.f32 %v20, %v20
  %v29 = vmul.f32 %v21, %v21
  %v30 = vadd.f32 %v22, %v26
  %v31 = vadd.f32 %v23, %v27
  %v32 = vadd.f32 %v24, %v28
  %v33 = vadd.f32 %v25, %v29
  %vm34 = vcmp.gt.f32.partialorder %v30, 0.0
  %vm35 = vcmp.gt.f32.partialorder %v31, 0.0
  %vm36 = vcmp.gt.f32.partialorder %v32, 0.0
  %vm37 = vcmp.gt.f32.partialorder %v33, 0.0
  %v38 = vsel %vm34, %v30, 1.0
  %v39 = vsel %vm35, %v31, 1.0
  %v40 = vsel %vm36, %v32, 1.0
  %v41 = vsel %vm37, %v33, 1.0
  %v42 = vrsqrt.pop %v38
  %v43 = vmul.f32 %v42, %v38
  %v44 = vmul.f32 %v43, %v42
  %v45 = vmul.f32 0.5, %v44
  %v46 = vsub.f32 1.5, %v45
  %v47 = vmul.f32 %v42, %v46
  %vm48 = vweird.f32 %v38
  %vm49 = vweird.f32 %v42
  %vm50 = vmor %vm48, %vm49
  %v51 = vsel %vm50, %v42, %v47
  %v52 = vrsqrt.pop %v39
  %v53 = vmul.f32 %v52, %v39
  %v54 = vmul.f32 %v53, %v52
  %v55 = vmul.f32 0.5, %v54
  %v56 = vsub.f32 1.5, %v55
  %v57 = vmul.f32 %v52, %v56
  %vm58 = vweird.f32 %v39
  %vm59 = vweird.f32 %v52
  %vm60 = vmor %vm58, %vm59
  %v61 = vsel %vm60, %v52, %v57
  %v62 = vrsqrt.pop %v40
  %v63 = vmul.f32 %v62, %v40
  %v64 = vmul.f32 %v63, %v62
  %v65 = vmul.f32 0.5, %v64
  %v66 = vsub.f32 1.5, %v65
  %v67 = vmul.f32 %v62, %v66
  %vm68 = vweird.f32 %v40
  %vm69 = vweird.f32 %v62
  %vm70 = vmor %vm68, %vm69
  %v71 = vsel %vm70, %v62, %v67
  %v72 = vrsqrt.pop %v41
  %v73 = vmul.f32 %v72, %v41
  %v74 = vmul.f32 %v73, %v72
  %v75 = vmul.f32 0.5, %v74
  %v76 = vsub.f32 1.5, %v75
  %v77 = vmul.f32 %v72, %v76
  %vm78 = vweird.f32 %v41
  %vm79 = vweird.f32 %v72
  %vm80 = vmor %vm78, %vm79
  %v81 = vsel %vm80, %v72, %v77
  %v82 = vmul.f32 %v30, %v51
  %v83 = vmul.f32 %v31, %v61
  %v84 = vmul.f32 %v32, %v71
  %v85 = vmul.f32 %v33, %v81
  %v86 = vstv %s12
  %v87 = vadd.f32 %v82, %v86
  %v88 = vadd.f32 %v83, %v86
  %v89 = vadd.f32 %v84, %v86
  %v90 = vadd.f32 %v85, %v86
  %v91 = vmax.f32 %v87, 0.0
  %v92 = vmax.f32 %v88, 0.0
  %v93 = vmax.f32 %v89, 0.0
  %v94 = vmax.f32 %v90, 0.0
  %v95 = vmul.f32 %v91, %v51
  %v96 = vmul.f32 %v92, %v61
  %v97 = vmul.f32 %v93, %v71
  %v98 = vmul.f32 %v94, %v81
  %v99 = vmul.f32 %v13, %v95
  %v100 = vmul.f32 %v14, %v96
  %v101 = vmul.f32 %v15, %v97
  %v102 = vmul.f32 %v16, %v98
  %v103 = vsel %vm34, %v99, %v91
  %v104 = vsel %vm35, %v100, %v92
  %v105 = vsel %vm36, %v101, %v93
  %v106 = vsel %vm37, %v102, %v94
  %107 = vst [vmem:[%s2] sm:$0xff] %v103
  %108 = vst [vmem:[%s2 + $0x8] sm:$0xff] %v104
  %109 = vst [vmem:[%s2 + $0x10] sm:$0xff] %v105
  %110 = vst [vmem:[%s2 + $0x18] sm:$0xff] %v106
  %v111 = vmul.f32 %v18, %v95
  %v112 = vmul.f32 %v19, %v96
  %v113 = vmul.f32 %v20, %v97
  %v114 = vmul.f32 %v21, %v98
  %s115 = scalar_lea.vmem %s2, 32
  %116 = vst [vmem:[%s115] sm:$0xff] %v111
  %117 = vst [vmem:[%s115 + $0x8] sm:$0xff] %v112
  %118 = vst [vmem:[%s115 + $0x10] sm:$0xff] %v113
  %119 = vst [vmem:[%s115 + $0x18] sm:$0xff] %v114
  // Predicated region
  $region10: #{modrelu_forward.1} parent=0 // pred_check
    _
  $region11: #{modrelu_forward.1} parent=0 // pred_check_branch
    %121 = sbr.rel (0) target = $region13
  $region12: #{modrelu_forward.1} parent=0 // pred_region
    _
  $region13: #{modrelu_forward.1} parent=0 // pred_fallthru
    _
  // Predicated region
  $region14: #{modrelu_forward.1} parent=0 // pred_check
    _
  $region15: #{modrelu_forward.1} parent=0 // pred_check_branch
    %123 = sbr.rel (0) target = $region17
  $region16: #{modrelu_forward.1} parent=0 // pred_region
    _
  $region17: #{modrelu_forward.1} parent=0 // pred_fallthru
    _

</llo_original>
